<compile_context>
chip_gen: v5e
topology: v5e:2x2
jax: 0.10.0
libtpu: 0.0.40
codegen_flags: <defaults>
</compile_context>

<pallas_src>
import functools

import jax
import jax.numpy as jnp
from jax.experimental import pallas as pl
from jax.experimental.pallas import tpu as pltpu


# ---------------------------------------------------------------------------
# Kernels (single invocation; no grid)
# ---------------------------------------------------------------------------
def _ensemble_mean_kernel(x_ref, w_ref, mb_ref, o_ref):
    """mode='mean'.

    x_ref:  (B, D)     flattened input, VMEM
    w_ref:  (M, D, K)  stacked per-model weights, full slab in VMEM
    mb_ref: (1, K)     mean of per-model biases (precomputed wrapper-side)
    o_ref:  (B, K)     output
    """
    x = x_ref[...]
    num_models = w_ref.shape[0]
    acc = jnp.zeros(o_ref.shape, jnp.float32)
    # M is small & static -> unrolled Python loop; each step is one MXU issue
    # and the accumulation stays in vregs (no per-model VMEM scratch traffic).
    for m in range(num_models):
        acc = acc + jnp.dot(x, w_ref[m], preferred_element_type=jnp.float32)
    o_ref[...] = (acc * (1.0 / num_models) + mb_ref[...]).astype(o_ref.dtype)


def _ensemble_ind_kernel(x_ref, w_ref, b_ref, o_ref):
    """mode='ind': all M sub-model outputs in one invocation, stacked on axis 0.

    x_ref: (B, D); w_ref: (M, D, K); b_ref: (M, 1, K); o_ref: (M, B, K)
    """
    x = x_ref[...]
    num_models = w_ref.shape[0]
    for m in range(num_models):
        o_ref[m] = (
            jnp.dot(x, w_ref[m], preferred_element_type=jnp.float32) + b_ref[m]
        ).astype(o_ref.dtype)


# ---------------------------------------------------------------------------
# Wrapper
# ---------------------------------------------------------------------------
@functools.partial(jax.jit, static_argnames=("mode", "compute_dtype"))
def ensemble_forward(x_nchw, weights, biases, mode="mean", compute_dtype=None):
    """x_nchw: [B, C, H, W]; weights: [M, D, K]; biases: [M, K]."""
    B = x_nchw.shape[0]
    M, D, K = weights.shape
    out_dtype = x_nchw.dtype

    x = x_nchw.reshape(B, D)  # glue: flatten NCHW -> [B, D]
    if compute_dtype is not None:
        # Bandwidth lever for v6e/v7x (weight-streaming bound at small B);
        # accumulation remains f32 inside the kernel.
        x = x.astype(compute_dtype)
        weights = weights.astype(compute_dtype)

    vmem_specs = dict(memory_space=pltpu.MemorySpace.VMEM)
    cost = pl.CostEstimate(
        flops=2 * M * B * D * K,
        transcendentals=0,
        bytes_accessed=(
            weights.size * weights.dtype.itemsize
            + x.size * x.dtype.itemsize
            + M * B * K * jnp.dtype(out_dtype).itemsize
            + biases.size * biases.dtype.itemsize
        ),
    )

    if mode == "mean":
        mean_bias = jnp.mean(biases.astype(jnp.float32), axis=0).reshape(1, K)
        out = pl.pallas_call(
            _ensemble_mean_kernel,
            out_shape=jax.ShapeDtypeStruct((B, K), out_dtype),
            in_specs=[
                pl.BlockSpec(**vmem_specs),  # x        (B, D)
                pl.BlockSpec(**vmem_specs),  # weights  (M, D, K)
                pl.BlockSpec(**vmem_specs),  # mean_bias (1, K)
            ],
            out_specs=pl.BlockSpec(**vmem_specs),
            cost_estimate=cost,
        )(x, weights, mean_bias)
        return out
    elif mode == "ind":
        out = pl.pallas_call(
            _ensemble_ind_kernel,
            out_shape=jax.ShapeDtypeStruct((M, B, K), out_dtype),
            in_specs=[
                pl.BlockSpec(**vmem_specs),  # x        (B, D)
                pl.BlockSpec(**vmem_specs),  # weights  (M, D, K)
                pl.BlockSpec(**vmem_specs),  # biases   (M, 1, K)
            ],
            out_specs=pl.BlockSpec(**vmem_specs),
            cost_estimate=cost,
        )(x, weights, biases.reshape(M, 1, K))
        return out
    else:
        raise NotImplementedError(mode)


# ---------------------------------------------------------------------------
# Reference (plain JAX) for validation
# ---------------------------------------------------------------------------
def ensemble_reference(x_nchw, weights, biases, mode="mean"):
    B = x_nchw.shape[0]
    M, D, K = weights.shape
    x = x_nchw.reshape(B, D)
    per_model = jnp.einsum("bd,mdk->mbk", x, weights) + biases[:, None, :]
    if mode == "mean":
        return jnp.mean(per_model, axis=0)
    return per_model


if __name__ == "__main__":
    # Small, module-consistent shapes: batch=2, channels=4, spatial=16x16,
    # num_models=3, num_classes=128 (lane-dense output).
    B, C, H, W = 2, 4, 16, 16
    M, K = 3, 128
    D = C * H * W

    key = jax.random.PRNGKey(0)
    kx, kw, kb = jax.random.split(key, 3)
    x = jax.random.normal(kx, (B, C, H, W), dtype=jnp.float32)
    # Deterministic per-model parameters (synthetic "ensemble" of M linear heads).
    weights = jax.random.normal(kw, (M, D, K), dtype=jnp.float32) * 0.02
    biases = jax.random.normal(kb, (M, K), dtype=jnp.float32) * 0.1

    # mode='mean' (default EnsembleModel behavior)
    out_mean = jax.block_until_ready(ensemble_forward(x, weights, biases, mode="mean"))
    ref_mean = ensemble_reference(x, weights, biases, mode="mean")
    assert out_mean.shape == (B, K)
    assert jnp.allclose(out_mean, ref_mean, atol=1e-4, rtol=1e-4)

    # mode='ind' (per-model stacked outputs)
    out_ind = jax.block_until_ready(ensemble_forward(x, weights, biases, mode="ind"))
    ref_ind = ensemble_reference(x, weights, biases, mode="ind")
    assert out_ind.shape == (M, B, K)
    assert jnp.allclose(out_ind, ref_ind, atol=1e-4, rtol=1e-4)

    # Optional bf16 weight/input streaming path (bandwidth lever on v6e/v7x);
    # looser tolerance since inputs are bf16-rounded, accumulation stays f32.
    out_bf16 = jax.block_until_ready(
        ensemble_forward(x, weights, biases, mode="mean", compute_dtype=jnp.bfloat16)
    )
    assert jnp.allclose(out_bf16, ref_mean, atol=3e-2, rtol=3e-2)

    # TODO(synk): self.softmax is defined in __init__ but never applied in
    # forward(), so it is intentionally not part of the kernel.
    print("KERNEL_OK")
</pallas_src>

<mosaic_0001>
module attributes {stable_mosaic.version = 11 : i64} {
  func.func @_ensemble_mean_kernel(%arg0: memref<2x1024xf32, #tpu.memory_space<vmem>>, %arg1: memref<3x1024x128xf32, #tpu.memory_space<vmem>>, %arg2: memref<1x128xf32, #tpu.memory_space<vmem>>, %arg3: memref<2x128xf32, #tpu.memory_space<vmem>>) attributes {dimension_semantics = [], scalar_prefetch = 0 : i64, scratch_operands = 0 : i64, tpu.core_type = #tpu.core_type<tc>} {
    %c0 = arith.constant 0 : index
    %c0_0 = arith.constant 0 : index
    %0 = vector.load %arg0[%c0, %c0_0] : memref<2x1024xf32, #tpu.memory_space<vmem>>, vector<2x1024xf32>
    %cst = arith.constant 0.000000e+00 : f32
    %1 = vector.broadcast %cst : f32 to vector<2x128xf32>
    %c0_1 = arith.constant 0 : index
    %c0_2 = arith.constant 0 : index
    %c0_3 = arith.constant 0 : index
    %2 = vector.load %arg1[%c0_1, %c0_2, %c0_3] : memref<3x1024x128xf32, #tpu.memory_space<vmem>>, vector<1x1024x128xf32>
    %3 = vector.shape_cast %2 : vector<1x1024x128xf32> to vector<1024x128xf32>
    %cst_4 = arith.constant dense<0.000000e+00> : vector<2x128xf32>
    %4 = tpu.matmul %0, %3, %cst_4 {dimension_numbers = #tpu.dot_dimension_numbers<[1], [0], [0], [1], [0, 0, 1, 1], [], []>} : vector<2x1024xf32>, vector<1024x128xf32>, vector<2x128xf32> -> vector<2x128xf32>
    %5 = arith.addf %1, %4 : vector<2x128xf32>
    %c1 = arith.constant 1 : index
    %c0_5 = arith.constant 0 : index
    %c0_6 = arith.constant 0 : index
    %6 = vector.load %arg1[%c1, %c0_5, %c0_6] : memref<3x1024x128xf32, #tpu.memory_space<vmem>>, vector<1x1024x128xf32>
    %7 = vector.shape_cast %6 : vector<1x1024x128xf32> to vector<1024x128xf32>
    %cst_7 = arith.constant dense<0.000000e+00> : vector<2x128xf32>
    %8 = tpu.matmul %0, %7, %cst_7 {dimension_numbers = #tpu.dot_dimension_numbers<[1], [0], [0], [1], [0, 0, 1, 1], [], []>} : vector<2x1024xf32>, vector<1024x128xf32>, vector<2x128xf32> -> vector<2x128xf32>
    %9 = arith.addf %5, %8 : vector<2x128xf32>
    %c2 = arith.constant 2 : index
    %c0_8 = arith.constant 0 : index
    %c0_9 = arith.constant 0 : index
    %10 = vector.load %arg1[%c2, %c0_8, %c0_9] : memref<3x1024x128xf32, #tpu.memory_space<vmem>>, vector<1x1024x128xf32>
    %11 = vector.shape_cast %10 : vector<1x1024x128xf32> to vector<1024x128xf32>
    %cst_10 = arith.constant dense<0.000000e+00> : vector<2x128xf32>
    %12 = tpu.matmul %0, %11, %cst_10 {dimension_numbers = #tpu.dot_dimension_numbers<[1], [0], [0], [1], [0, 0, 1, 1], [], []>} : vector<2x1024xf32>, vector<1024x128xf32>, vector<2x128xf32> -> vector<2x128xf32>
    %13 = arith.addf %9, %12 : vector<2x128xf32>
    %cst_11 = arith.constant 0.333333343 : f32
    %14 = vector.broadcast %cst_11 : f32 to vector<2x128xf32>
    %15 = arith.mulf %13, %14 : vector<2x128xf32>
    %c0_12 = arith.constant 0 : index
    %c0_13 = arith.constant 0 : index
    %16 = vector.load %arg2[%c0_12, %c0_13] : memref<1x128xf32, #tpu.memory_space<vmem>>, vector<1x128xf32>
    %17 = vector.broadcast %16 : vector<1x128xf32> to vector<2x128xf32>
    %18 = arith.addf %15, %17 : vector<2x128xf32>
    %c0_14 = arith.constant 0 : index
    %c0_15 = arith.constant 0 : index
    %19 = vector.load %arg3[%c0_14, %c0_15] : memref<2x128xf32, #tpu.memory_space<vmem>>, vector<2x128xf32>
    tpu.vector_store %arg3[%c0_14, %c0_15], %18 {strides = array<i32>} : memref<2x128xf32, #tpu.memory_space<vmem>>, vector<2x128xf32>,
    return
  }
}

</mosaic_0001>

<llo_original>
// kernel: ensemble_forward.1
$region0: #{ensemble_forward.1}
  #allocation0 [shape = 'u32[]', space=smem, size = 0x4, offset = 0x4, fixed_abs, tag = 'smem constant byte address 0x4 - core index']
  #allocation1 [shape = 'u32[72,128]{1,0:T(1,128)}', space=vmem, size = 0x9000, scoped, tag = 'internal scratch']
  %s0 = inlined_call_operand.vmem [shape: f32[2,1024], index: 0, kind: input, shape index: {}]
  %s1 = inlined_call_operand.hbm [shape: f32[3,1024,128], index: 1, kind: input, shape index: {}]
  %s2 = inlined_call_operand.vmem [shape: f32[1,128], index: 2, kind: input, shape index: {}]
  %s3 = inlined_call_operand.hbm [shape: f32[2,128], index: 3, kind: output, shape index: {}]
  %s4 = sld [smem:[#allocation0]]
  $region26: #{ensemble_forward.1} parent=0
    _
  %s6 = ssub.s32 1, %s4
  %s7 = scalar_select 0, %s6, %s4
  $region1: #{ensemble_forward.1} parent=0
    #allocation2 [shape = 'u8[1572864]{0}', space=vmem, size = 0x180000, scoped, tag = 'input window, operand 1, single buffered']
    #allocation3 [shape = 's32[1]{0}', space=sflag, size = 0x4, scoped, tag = 'scoped memory for ensemble_forward.1']
    #allocation4 [shape = 's32[1]{0}', space=sflag, size = 0x4, scoped, tag = 'scoped memory for ensemble_forward.1']
    #allocation5 [shape = 'u8[1024]{0}', space=vmem, size = 0x400, scoped, tag = 'output window, operand 0, single buffered']
    %8 = vsyncpa [#allocation3], 0
    %9 = vsyncpa [#allocation4], 0
    // Predicated region
    $region2: #{ensemble_forward.1} parent=1 // pred_check
      _
    $region3: #{ensemble_forward.1} parent=1 // pred_check_branch
      %11 = sbr.rel (0) target = $region5
    $region4: #{ensemble_forward.1} parent=1 // pred_region
      _
    $region5: #{ensemble_forward.1} parent=1 // pred_fallthru
      _
    // Predicated region
    $region6: #{ensemble_forward.1} parent=1 // pred_check
      _
    $region7: #{ensemble_forward.1} parent=1 // pred_check_branch
      %13 = sbr.rel (0) target = $region9
    $region8: #{ensemble_forward.1} parent=1 // pred_region
      %15 = vsyncadd [#allocation3], 0
      %s16 = sshll.u32 %s1, 4
      %s17 = int_to_ptr.hbm [resolvable:$true] %s16
      %s18 = sshll.u32 [#allocation2], 4
      %s19 = int_to_ptr.vmem [resolvable:$true] %s18
      %24 = dma.hbm_to_vmem [thread:$0]  %s17, 49152, %s19, [#allocation3], 128, 128, 8
    $region9: #{ensemble_forward.1} parent=1 // pred_fallthru
      _
    // Predicated region
    $region10: #{ensemble_forward.1} parent=1 // pred_check
      _
    $region11: #{ensemble_forward.1} parent=1 // pred_check_branch
      %26 = sbr.rel (0) target = $region13
    $region12: #{ensemble_forward.1} parent=1 // pred_region
      _
    $region13: #{ensemble_forward.1} parent=1 // pred_fallthru
      _
    // Predicated region
    $region14: #{ensemble_forward.1} parent=1 // pred_check
      _
    $region15: #{ensemble_forward.1} parent=1 // pred_check_branch
      %28 = sbr.rel (0) target = $region17
    $region16: #{ensemble_forward.1} parent=1 // pred_region
      %30 = dma.done [#allocation3], 49152
    $region17: #{ensemble_forward.1} parent=1 // pred_fallthru
      _
    %v31 = vld [vmem:[%s0] sm:$0xff]
    %v32 = vld [vmem:[%s0 + $0x8] sm:$0xff]
    %v33 = vld [vmem:[#allocation2] sm:$0xff]
    %v34 = vld [vmem:[#allocation2 + $0x8] sm:$0xff]
    %v35 = vld [vmem:[#allocation2 + $0x10] sm:$0xff]
    %v36 = vld [vmem:[#allocation2 + $0x18] sm:$0xff]
    %v37 = vld [vmem:[#allocation2 + $0x20] sm:$0xff]
    %v38 = vld [vmem:[#allocation2 + $0x28] sm:$0xff]
    %v39 = vld [vmem:[#allocation2 + $0x30] sm:$0xff]
    %v40 = vld [vmem:[#allocation2 + $0x38] sm:$0xff]
    %v41 = vld [vmem:[#allocation2 + $0x40] sm:$0xff]
    %v42 = vld [vmem:[#allocation2 + $0x48] sm:$0xff]
    %v43 = vld [vmem:[#allocation2 + $0x50] sm:$0xff]
    %v44 = vld [vmem:[#allocation2 + $0x58] sm:$0xff]
    %v45 = vld [vmem:[#allocation2 + $0x60] sm:$0xff]
    %v46 = vld [vmem:[#allocation2 + $0x68] sm:$0xff]
    %v47 = vld [vmem:[#allocation2 + $0x70] sm:$0xff]
    %v48 = vld [vmem:[#allocation2 + $0x78] sm:$0xff]
    %v49 = vld [vmem:[#allocation2 + $0x80] sm:$0xff]
    %v50 = vld [vmem:[#allocation2 + $0x88] sm:$0xff]
    %v51 = vld [vmem:[#allocation2 + $0x90] sm:$0xff]
    %v52 = vld [vmem:[#allocation2 + $0x98] sm:$0xff]
    %v53 = vld [vmem:[#allocation2 + $0xa0] sm:$0xff]
    %v54 = vld [vmem:[#allocation2 + $0xa8] sm:$0xff]
    %v55 = vld [vmem:[#allocation2 + $0xb0] sm:$0xff]
    %v56 = vld [vmem:[#allocation2 + $0xb8] sm:$0xff]
    %v57 = vld [vmem:[#allocation2 + $0xc0] sm:$0xff]
    %v58 = vld [vmem:[#allocation2 + $0xc8] sm:$0xff]
    %v59 = vld [vmem:[#allocation2 + $0xd0] sm:$0xff]
    %v60 = vld [vmem:[#allocation2 + $0xd8] sm:$0xff]
    %v61 = vld [vmem:[#allocation2 + $0xe0] sm:$0xff]
    %v62 = vld [vmem:[#allocation2 + $0xe8] sm:$0xff]
    %v63 = vld [vmem:[#allocation2 + $0xf0] sm:$0xff]
    %v64 = vld [vmem:[#allocation2 + $0xf8] sm:$0xff]
    %v65 = vld [vmem:[#allocation2 + $0x100] sm:$0xff]
    %v66 = vld [vmem:[#allocation2 + $0x108] sm:$0xff]
    %v67 = vld [vmem:[#allocation2 + $0x110] sm:$0xff]
    %v68 = vld [vmem:[#allocation2 + $0x118] sm:$0xff]
    %v69 = vld [vmem:[#allocation2 + $0x120] sm:$0xff]
    %v70 = vld [vmem:[#allocation2 + $0x128] sm:$0xff]
    %v71 = vld [vmem:[#allocation2 + $0x130] sm:$0xff]
    %v72 = vld [vmem:[#allocation2 + $0x138] sm:$0xff]
    %v73 = vld [vmem:[#allocation2 + $0x140] sm:$0xff]
    %v74 = vld [vmem:[#allocation2 + $0x148] sm:$0xff]
    %v75 = vld [vmem:[#allocation2 + $0x150] sm:$0xff]
    %v76 = vld [vmem:[#allocation2 + $0x158] sm:$0xff]
    %v77 = vld [vmem:[#allocation2 + $0x160] sm:$0xff]
    %v78 = vld [vmem:[#allocation2 + $0x168] sm:$0xff]
    %v79 = vld [vmem:[#allocation2 + $0x170] sm:$0xff]
    %v80 = vld [vmem:[#allocation2 + $0x178] sm:$0xff]
    %v81 = vld [vmem:[#allocation2 + $0x180] sm:$0xff]
    %v82 = vld [vmem:[#allocation2 + $0x188] sm:$0xff]
    %v83 = vld [vmem:[#allocation2 + $0x190] sm:$0xff]
    %v84 = vld [vmem:[#allocation2 + $0x198] sm:$0xff]
    %v85 = vld [vmem:[#allocation2 + $0x1a0] sm:$0xff]
    %v86 = vld [vmem:[#allocation2 + $0x1a8] sm:$0xff]
    %v87 = vld [vmem:[#allocation2 + $0x1b0] sm:$0xff]
    %v88 = vld [vmem:[#allocation2 + $0x1b8] sm:$0xff]
    %v89 = vld [vmem:[#allocation2 + $0x1c0] sm:$0xff]
    %v90 = vld [vmem:[#allocation2 + $0x1c8] sm:$0xff]
    %v91 = vld [vmem:[#allocation2 + $0x1d0] sm:$0xff]
    %v92 = vld [vmem:[#allocation2 + $0x1d8] sm:$0xff]
    %v93 = vld [vmem:[#allocation2 + $0x1e0] sm:$0xff]
    %v94 = vld [vmem:[#allocation2 + $0x1e8] sm:$0xff]
    %v95 = vld [vmem:[#allocation2 + $0x1f0] sm:$0xff]
    %v96 = vld [vmem:[#allocation2 + $0x1f8] sm:$0xff]
    %v97 = vld [vmem:[#allocation2 + $0x200] sm:$0xff]
    %v98 = vld [vmem:[#allocation2 + $0x208] sm:$0xff]
    %v99 = vld [vmem:[#allocation2 + $0x210] sm:$0xff]
    %v100 = vld [vmem:[#allocation2 + $0x218] sm:$0xff]
    %v101 = vld [vmem:[#allocation2 + $0x220] sm:$0xff]
    %v102 = vld [vmem:[#allocation2 + $0x228] sm:$0xff]
    %v103 = vld [vmem:[#allocation2 + $0x230] sm:$0xff]
    %v104 = vld [vmem:[#allocation2 + $0x238] sm:$0xff]
    %v105 = vld [vmem:[#allocation2 + $0x240] sm:$0xff]
    %v106 = vld [vmem:[#allocation2 + $0x248] sm:$0xff]
    %v107 = vld [vmem:[#allocation2 + $0x250] sm:$0xff]
    %v108 = vld [vmem:[#allocation2 + $0x258] sm:$0xff]
    %v109 = vld [vmem:[#allocation2 + $0x260] sm:$0xff]
    %v110 = vld [vmem:[#allocation2 + $0x268] sm:$0xff]
    %v111 = vld [vmem:[#allocation2 + $0x270] sm:$0xff]
    %v112 = vld [vmem:[#allocation2 + $0x278] sm:$0xff]
    %v113 = vld [vmem:[#allocation2 + $0x280] sm:$0xff]
    %v114 = vld [vmem:[#allocation2 + $0x288] sm:$0xff]
    %v115 = vld [vmem:[#allocation2 + $0x290] sm:$0xff]
    %v116 = vld [vmem:[#allocation2 + $0x298] sm:$0xff]
    %v117 = vld [vmem:[#allocation2 + $0x2a0] sm:$0xff]
    %v118 = vld [vmem:[#allocation2 + $0x2a8] sm:$0xff]
    %v119 = vld [vmem:[#allocation2 + $0x2b0] sm:$0xff]
    %v120 = vld [vmem:[#allocation2 + $0x2b8] sm:$0xff]
    %v121 = vld [vmem:[#allocation2 + $0x2c0] sm:$0xff]
    %v122 = vld [vmem:[#allocation2 + $0x2c8] sm:$0xff]
    %v123 = vld [vmem:[#allocation2 + $0x2d0] sm:$0xff]
    %v124 = vld [vmem:[#allocation2 + $0x2d8] sm:$0xff]
    %v125 = vld [vmem:[#allocation2 + $0x2e0] sm:$0xff]
    %v126 = vld [vmem:[#allocation2 + $0x2e8] sm:$0xff]
    %v127 = vld [vmem:[#allocation2 + $0x2f0] sm:$0xff]
    %v128 = vld [vmem:[#allocation2 + $0x2f8] sm:$0xff]
    %v129 = vld [vmem:[#allocation2 + $0x300] sm:$0xff]
    %v130 = vld [vmem:[#allocation2 + $0x308] sm:$0xff]
    %v131 = vld [vmem:[#allocation2 + $0x310] sm:$0xff]
    %v132 = vld [vmem:[#allocation2 + $0x318] sm:$0xff]
    %v133 = vld [vmem:[#allocation2 + $0x320] sm:$0xff]
    %v134 = vld [vmem:[#allocation2 + $0x328] sm:$0xff]
    %v135 = vld [vmem:[#allocation2 + $0x330] sm:$0xff]
    %v136 = vld [vmem:[#allocation2 + $0x338] sm:$0xff]
    %v137 = vld [vmem:[#allocation2 + $0x340] sm:$0xff]
    %v138 = vld [vmem:[#allocation2 + $0x348] sm:$0xff]
    %v139 = vld [vmem:[#allocation2 + $0x350] sm:$0xff]
    %v140 = vld [vmem:[#allocation2 + $0x358] sm:$0xff]
    %v141 = vld [vmem:[#allocation2 + $0x360] sm:$0xff]
    %v142 = vld [vmem:[#allocation2 + $0x368] sm:$0xff]
    %v143 = vld [vmem:[#allocation2 + $0x370] sm:$0xff]
    %v144 = vld [vmem:[#allocation2 + $0x378] sm:$0xff]
    %v145 = vld [vmem:[#allocation2 + $0x380] sm:$0xff]
    %v146 = vld [vmem:[#allocation2 + $0x388] sm:$0xff]
    %v147 = vld [vmem:[#allocation2 + $0x390] sm:$0xff]
    %v148 = vld [vmem:[#allocation2 + $0x398] sm:$0xff]
    %v149 = vld [vmem:[#allocation2 + $0x3a0] sm:$0xff]
    %v150 = vld [vmem:[#allocation2 + $0x3a8] sm:$0xff]
    %v151 = vld [vmem:[#allocation2 + $0x3b0] sm:$0xff]
    %v152 = vld [vmem:[#allocation2 + $0x3b8] sm:$0xff]
    %v153 = vld [vmem:[#allocation2 + $0x3c0] sm:$0xff]
    %v154 = vld [vmem:[#allocation2 + $0x3c8] sm:$0xff]
    %v155 = vld [vmem:[#allocation2 + $0x3d0] sm:$0xff]
    %v156 = vld [vmem:[#allocation2 + $0x3d8] sm:$0xff]
    %v157 = vld [vmem:[#allocation2 + $0x3e0] sm:$0xff]
    %v158 = vld [vmem:[#allocation2 + $0x3e8] sm:$0xff]
    %v159 = vld [vmem:[#allocation2 + $0x3f0] sm:$0xff]
    %v160 = vld [vmem:[#allocation2 + $0x3f8] sm:$0xff]
    %s161 = scalar_lea.vmem [#allocation2], 1024
    %v162 = vld [vmem:[%s161] sm:$0xff]
    %v163 = vld [vmem:[%s161 + $0x8] sm:$0xff]
    %v164 = vld [vmem:[%s161 + $0x10] sm:$0xff]
    %v165 = vld [vmem:[%s161 + $0x18] sm:$0xff]
    %v166 = vld [vmem:[%s161 + $0x20] sm:$0xff]
    %v167 = vld [vmem:[%s161 + $0x28] sm:$0xff]
    %v168 = vld [vmem:[%s161 + $0x30] sm:$0xff]
    %v169 = vld [vmem:[%s161 + $0x38] sm:$0xff]
    %v170 = vld [vmem:[%s161 + $0x40] sm:$0xff]
    %v171 = vld [vmem:[%s161 + $0x48] sm:$0xff]
    %v172 = vld [vmem:[%s161 + $0x50] sm:$0xff]
    %v173 = vld [vmem:[%s161 + $0x58] sm:$0xff]
    %v174 = vld [vmem:[%s161 + $0x60] sm:$0xff]
    %v175 = vld [vmem:[%s161 + $0x68] sm:$0xff]
    %v176 = vld [vmem:[%s161 + $0x70] sm:$0xff]
    %v177 = vld [vmem:[%s161 + $0x78] sm:$0xff]
    %v178 = vld [vmem:[%s161 + $0x80] sm:$0xff]
    %v179 = vld [vmem:[%s161 + $0x88] sm:$0xff]
    %v180 = vld [vmem:[%s161 + $0x90] sm:$0xff]
    %v181 = vld [vmem:[%s161 + $0x98] sm:$0xff]
    %v182 = vld [vmem:[%s161 + $0xa0] sm:$0xff]
    %v183 = vld [vmem:[%s161 + $0xa8] sm:$0xff]
    %v184 = vld [vmem:[%s161 + $0xb0] sm:$0xff]
    %v185 = vld [vmem:[%s161 + $0xb8] sm:$0xff]
    %v186 = vld [vmem:[%s161 + $0xc0] sm:$0xff]
    %v187 = vld [vmem:[%s161 + $0xc8] sm:$0xff]
    %v188 = vld [vmem:[%s161 + $0xd0] sm:$0xff]
    %v189 = vld [vmem:[%s161 + $0xd8] sm:$0xff]
    %v190 = vld [vmem:[%s161 + $0xe0] sm:$0xff]
    %v191 = vld [vmem:[%s161 + $0xe8] sm:$0xff]
    %v192 = vld [vmem:[%s161 + $0xf0] sm:$0xff]
    %v193 = vld [vmem:[%s161 + $0xf8] sm:$0xff]
    %v194 = vld [vmem:[%s161 + $0x100] sm:$0xff]
    %v195 = vld [vmem:[%s161 + $0x108] sm:$0xff]
    %v196 = vld [vmem:[%s161 + $0x110] sm:$0xff]
    %v197 = vld [vmem:[%s161 + $0x118] sm:$0xff]
    %v198 = vld [vmem:[%s161 + $0x120] sm:$0xff]
    %v199 = vld [vmem:[%s161 + $0x128] sm:$0xff]
    %v200 = vld [vmem:[%s161 + $0x130] sm:$0xff]
    %v201 = vld [vmem:[%s161 + $0x138] sm:$0xff]
    %v202 = vld [vmem:[%s161 + $0x140] sm:$0xff]
    %v203 = vld [vmem:[%s161 + $0x148] sm:$0xff]
    %v204 = vld [vmem:[%s161 + $0x150] sm:$0xff]
    %v205 = vld [vmem:[%s161 + $0x158] sm:$0xff]
    %v206 = vld [vmem:[%s161 + $0x160] sm:$0xff]
    %v207 = vld [vmem:[%s161 + $0x168] sm:$0xff]
    %v208 = vld [vmem:[%s161 + $0x170] sm:$0xff]
    %v209 = vld [vmem:[%s161 + $0x178] sm:$0xff]
    %v210 = vld [vmem:[%s161 + $0x180] sm:$0xff]
    %v211 = vld [vmem:[%s161 + $0x188] sm:$0xff]
    %v212 = vld [vmem:[%s161 + $0x190] sm:$0xff]
    %v213 = vld [vmem:[%s161 + $0x198] sm:$0xff]
    %v214 = vld [vmem:[%s161 + $0x1a0] sm:$0xff]
    %v215 = vld [vmem:[%s161 + $0x1a8] sm:$0xff]
    %v216 = vld [vmem:[%s161 + $0x1b0] sm:$0xff]
    %v217 = vld [vmem:[%s161 + $0x1b8] sm:$0xff]
    %v218 = vld [vmem:[%s161 + $0x1c0] sm:$0xff]
    %v219 = vld [vmem:[%s161 + $0x1c8] sm:$0xff]
    %v220 = vld [vmem:[%s161 + $0x1d0] sm:$0xff]
    %v221 = vld [vmem:[%s161 + $0x1d8] sm:$0xff]
    %v222 = vld [vmem:[%s161 + $0x1e0] sm:$0xff]
    %v223 = vld [vmem:[%s161 + $0x1e8] sm:$0xff]
    %v224 = vld [vmem:[%s161 + $0x1f0] sm:$0xff]
    %v225 = vld [vmem:[%s161 + $0x1f8] sm:$0xff]
    %v226 = vld [vmem:[%s161 + $0x200] sm:$0xff]
    %v227 = vld [vmem:[%s161 + $0x208] sm:$0xff]
    %v228 = vld [vmem:[%s161 + $0x210] sm:$0xff]
    %v229 = vld [vmem:[%s161 + $0x218] sm:$0xff]
    %v230 = vld [vmem:[%s161 + $0x220] sm:$0xff]
    %v231 = vld [vmem:[%s161 + $0x228] sm:$0xff]
    %v232 = vld [vmem:[%s161 + $0x230] sm:$0xff]
    %v233 = vld [vmem:[%s161 + $0x238] sm:$0xff]
    %v234 = vld [vmem:[%s161 + $0x240] sm:$0xff]
    %v235 = vld [vmem:[%s161 + $0x248] sm:$0xff]
    %v236 = vld [vmem:[%s161 + $0x250] sm:$0xff]
    %v237 = vld [vmem:[%s161 + $0x258] sm:$0xff]
    %v238 = vld [vmem:[%s161 + $0x260] sm:$0xff]
    %v239 = vld [vmem:[%s161 + $0x268] sm:$0xff]
    %v240 = vld [vmem:[%s161 + $0x270] sm:$0xff]
    %v241 = vld [vmem:[%s161 + $0x278] sm:$0xff]
    %v242 = vld [vmem:[%s161 + $0x280] sm:$0xff]
    %v243 = vld [vmem:[%s161 + $0x288] sm:$0xff]
    %v244 = vld [vmem:[%s161 + $0x290] sm:$0xff]
    %v245 = vld [vmem:[%s161 + $0x298] sm:$0xff]
    %v246 = vld [vmem:[%s161 + $0x2a0] sm:$0xff]
    %v247 = vld [vmem:[%s161 + $0x2a8] sm:$0xff]
    %v248 = vld [vmem:[%s161 + $0x2b0] sm:$0xff]
    %v249 = vld [vmem:[%s161 + $0x2b8] sm:$0xff]
    %v250 = vld [vmem:[%s161 + $0x2c0] sm:$0xff]
    %v251 = vld [vmem:[%s161 + $0x2c8] sm:$0xff]
    %v252 = vld [vmem:[%s161 + $0x2d0] sm:$0xff]
    %v253 = vld [vmem:[%s161 + $0x2d8] sm:$0xff]
    %v254 = vld [vmem:[%s161 + $0x2e0] sm:$0xff]
    %v255 = vld [vmem:[%s161 + $0x2e8] sm:$0xff]
    %v256 = vld [vmem:[%s161 + $0x2f0] sm:$0xff]
    %v257 = vld [vmem:[%s161 + $0x2f8] sm:$0xff]
    %v258 = vld [vmem:[%s161 + $0x300] sm:$0xff]
    %v259 = vld [vmem:[%s161 + $0x308] sm:$0xff]
    %v260 = vld [vmem:[%s161 + $0x310] sm:$0xff]
    %v261 = vld [vmem:[%s161 + $0x318] sm:$0xff]
    %v262 = vld [vmem:[%s161 + $0x320] sm:$0xff]
    %v263 = vld [vmem:[%s161 + $0x328] sm:$0xff]
    %v264 = vld [vmem:[%s161 + $0x330] sm:$0xff]
    %v265 = vld [vmem:[%s161 + $0x338] sm:$0xff]
    %v266 = vld [vmem:[%s161 + $0x340] sm:$0xff]
    %v267 = vld [vmem:[%s161 + $0x348] sm:$0xff]
    %v268 = vld [vmem:[%s161 + $0x350] sm:$0xff]
    %v269 = vld [vmem:[%s161 + $0x358] sm:$0xff]
    %v270 = vld [vmem:[%s161 + $0x360] sm:$0xff]
    %v271 = vld [vmem:[%s161 + $0x368] sm:$0xff]
    %v272 = vld [vmem:[%s161 + $0x370] sm:$0xff]
    %v273 = vld [vmem:[%s161 + $0x378] sm:$0xff]
    %v274 = vld [vmem:[%s161 + $0x380] sm:$0xff]
    %v275 = vld [vmem:[%s161 + $0x388] sm:$0xff]
    %v276 = vld [vmem:[%s161 + $0x390] sm:$0xff]
    %v277 = vld [vmem:[%s161 + $0x398] sm:$0xff]
    %v278 = vld [vmem:[%s161 + $0x3a0] sm:$0xff]
    %v279 = vld [vmem:[%s161 + $0x3a8] sm:$0xff]
    %v280 = vld [vmem:[%s161 + $0x3b0] sm:$0xff]
    %v281 = vld [vmem:[%s161 + $0x3b8] sm:$0xff]
    %v282 = vld [vmem:[%s161 + $0x3c0] sm:$0xff]
    %v283 = vld [vmem:[%s161 + $0x3c8] sm:$0xff]
    %v284 = vld [vmem:[%s161 + $0x3d0] sm:$0xff]
    %v285 = vld [vmem:[%s161 + $0x3d8] sm:$0xff]
    %v286 = vld [vmem:[%s161 + $0x3e0] sm:$0xff]
    %v287 = vld [vmem:[%s161 + $0x3e8] sm:$0xff]
    %v288 = vld [vmem:[%s161 + $0x3f0] sm:$0xff]
    %v289 = vld [vmem:[%s161 + $0x3f8] sm:$0xff]
    %292 = vst [vmem:[#allocation1] ss:$4 sm:$0xff] %v31
    %s293 = scalar_lea.vmem [#allocation1], 32
    %294 = vst [vmem:[%s293] ss:$4 sm:$0xff] %v32
    %v295 = vld.sshfl [vmem:[#allocation1] sm:$0xff pattern:$0x73625140]
    %v296 = vld.sshfl [vmem:[#allocation1 + $0x8] sm:$0xff pattern:$0x73625140]
    %v297 = vld.sshfl [vmem:[#allocation1 + $0x10] sm:$0xff pattern:$0x73625140]
    %v298 = vld.sshfl [vmem:[#allocation1 + $0x18] sm:$0xff pattern:$0x73625140]
    %v299 = vld.sshfl [vmem:[#allocation1 + $0x20] sm:$0xff pattern:$0x73625140]
    %v300 = vld.sshfl [vmem:[#allocation1 + $0x28] sm:$0xff pattern:$0x73625140]
    %v301 = vld.sshfl [vmem:[#allocation1 + $0x30] sm:$0xff pattern:$0x73625140]
    %v302 = vld.sshfl [vmem:[#allocation1 + $0x38] sm:$0xff pattern:$0x73625140]
    %311 = vmatpush.msra.mxu0 %v177
    %312 = vmatpush.msra.mxu0 %v176
    %313 = vmatpush.msra.mxu0 %v175
    %314 = vmatpush.msra.mxu0 %v174
    %315 = vmatpush.msra.mxu0 %v173
    %316 = vmatpush.msra.mxu0 %v172
    %317 = vmatpush.msra.mxu0 %v171
    %318 = vmatpush.msra.mxu0 %v170
    %319 = vmatpush.msra.mxu0 %v169
    %320 = vmatpush.msra.mxu0 %v168
    %321 = vmatpush.msra.mxu0 %v167
    %322 = vmatpush.msra.mxu0 %v166
    %323 = vmatpush.msra.mxu0 %v165
    %324 = vmatpush.msra.mxu0 %v164
    %325 = vmatpush.msra.mxu0 %v163
    %326 = vmatpush.msra.mxu0 %v162
    %327 = vmatmul.f32.gmra.mxu0 %v295
    %v328 = vpop.f32.mrf.mxu0
    %v329 = vadd.f32 0.0, %v328
    %330 = vdwg.mxu0
    %331 = vmatpush.msra.mxu0 %v193
    %332 = vmatpush.msra.mxu0 %v192
    %333 = vmatpush.msra.mxu0 %v191
    %334 = vmatpush.msra.mxu0 %v190
    %335 = vmatpush.msra.mxu0 %v189
    %336 = vmatpush.msra.mxu0 %v188
    %337 = vmatpush.msra.mxu0 %v187
    %338 = vmatpush.msra.mxu0 %v186
    %339 = vmatpush.msra.mxu0 %v185
    %340 = vmatpush.msra.mxu0 %v184
    %341 = vmatpush.msra.mxu0 %v183
    %342 = vmatpush.msra.mxu0 %v182
    %343 = vmatpush.msra.mxu0 %v181
    %344 = vmatpush.msra.mxu0 %v180
    %345 = vmatpush.msra.mxu0 %v179
    %346 = vmatpush.msra.mxu0 %v178
    %347 = vmatmul.f32.gmra.mxu0 %v296
    %v348 = vpop.f32.mrf.mxu0
    %v349 = vadd.f32 %v329, %v348
    %350 = vdwg.mxu0
    %351 = vmatpush.msra.mxu0 %v209
    %352 = vmatpush.msra.mxu0 %v208
    %353 = vmatpush.msra.mxu0 %v207
    %354 = vmatpush.msra.mxu0 %v206
    %355 = vmatpush.msra.mxu0 %v205
    %356 = vmatpush.msra.mxu0 %v204
    %357 = vmatpush.msra.mxu0 %v203
    %358 = vmatpush.msra.mxu0 %v202
    %359 = vmatpush.msra.mxu0 %v201
    %360 = vmatpush.msra.mxu0 %v200
    %361 = vmatpush.msra.mxu0 %v199
    %362 = vmatpush.msra.mxu0 %v198
    %363 = vmatpush.msra.mxu0 %v197
    %364 = vmatpush.msra.mxu0 %v196
    %365 = vmatpush.msra.mxu0 %v195
    %366 = vmatpush.msra.mxu0 %v194
    %367 = vmatmul.f32.gmra.mxu0 %v297
    %v368 = vpop.f32.mrf.mxu0
    %v369 = vadd.f32 %v349, %v368
    %370 = vdwg.mxu0
    %371 = vmatpush.msra.mxu0 %v225
    %372 = vmatpush.msra.mxu0 %v224
    %373 = vmatpush.msra.mxu0 %v223
    %374 = vmatpush.msra.mxu0 %v222
    %375 = vmatpush.msra.mxu0 %v221
    %376 = vmatpush.msra.mxu0 %v220
    %377 = vmatpush.msra.mxu0 %v219
    %378 = vmatpush.msra.mxu0 %v218
    %379 = vmatpush.msra.mxu0 %v217
    %380 = vmatpush.msra.mxu0 %v216
    %381 = vmatpush.msra.mxu0 %v215
    %382 = vmatpush.msra.mxu0 %v214
    %383 = vmatpush.msra.mxu0 %v213
    %384 = vmatpush.msra.mxu0 %v212
    %385 = vmatpush.msra.mxu0 %v211
    %386 = vmatpush.msra.mxu0 %v210
    %387 = vmatmul.f32.gmra.mxu0 %v298
    %v388 = vpop.f32.mrf.mxu0
    %v389 = vadd.f32 %v369, %v388
    %390 = vdwg.mxu0
    %391 = vmatpush.msra.mxu0 %v241
    %392 = vmatpush.msra.mxu0 %v240
    %393 = vmatpush.msra.mxu0 %v239
    %394 = vmatpush.msra.mxu0 %v238
    %395 = vmatpush.msra.mxu0 %v237
    %396 = vmatpush.msra.mxu0 %v236
    %397 = vmatpush.msra.mxu0 %v235
    %398 = vmatpush.msra.mxu0 %v234
    %399 = vmatpush.msra.mxu0 %v233
    %400 = vmatpush.msra.mxu0 %v232
    %401 = vmatpush.msra.mxu0 %v231
    %402 = vmatpush.msra.mxu0 %v230
    %403 = vmatpush.msra.mxu0 %v229
    %404 = vmatpush.msra.mxu0 %v228
    %405 = vmatpush.msra.mxu0 %v227
    %406 = vmatpush.msra.mxu0 %v226
    %407 = vmatmul.f32.gmra.mxu0 %v299
    %v408 = vpop.f32.mrf.mxu0
    %v409 = vadd.f32 %v389, %v408
    %410 = vdwg.mxu0
    %411 = vmatpush.msra.mxu0 %v257
    %412 = vmatpush.msra.mxu0 %v256
    %413 = vmatpush.msra.mxu0 %v255
    %414 = vmatpush.msra.mxu0 %v254
    %415 = vmatpush.msra.mxu0 %v253
    %416 = vmatpush.msra.mxu0 %v252
    %417 = vmatpush.msra.mxu0 %v251
    %418 = vmatpush.msra.mxu0 %v250
    %419 = vmatpush.msra.mxu0 %v249
    %420 = vmatpush.msra.mxu0 %v248
    %421 = vmatpush.msra.mxu0 %v247
    %422 = vmatpush.msra.mxu0 %v246
    %423 = vmatpush.msra.mxu0 %v245
    %424 = vmatpush.msra.mxu0 %v244
    %425 = vmatpush.msra.mxu0 %v243
    %426 = vmatpush.msra.mxu0 %v242
    %427 = vmatmul.f32.gmra.mxu0 %v300
    %v428 = vpop.f32.mrf.mxu0
    %v429 = vadd.f32 %v409, %v428
    %430 = vdwg.mxu0
    %431 = vmatpush.msra.mxu0 %v273
    %432 = vmatpush.msra.mxu0 %v272
    %433 = vmatpush.msra.mxu0 %v271
    %434 = vmatpush.msra.mxu0 %v270
    %435 = vmatpush.msra.mxu0 %v269
    %436 = vmatpush.msra.mxu0 %v268
    %437 = vmatpush.msra.mxu0 %v267
    %438 = vmatpush.msra.mxu0 %v266
    %439 = vmatpush.msra.mxu0 %v265
    %440 = vmatpush.msra.mxu0 %v264
    %441 = vmatpush.msra.mxu0 %v263
    %442 = vmatpush.msra.mxu0 %v262
    %443 = vmatpush.msra.mxu0 %v261
    %444 = vmatpush.msra.mxu0 %v260
    %445 = vmatpush.msra.mxu0 %v259
    %446 = vmatpush.msra.mxu0 %v258
    %447 = vmatmul.f32.gmra.mxu0 %v301
    %v448 = vpop.f32.mrf.mxu0
    %v449 = vadd.f32 %v429, %v448
    %450 = vdwg.mxu0
    %451 = vmatpush.msra.mxu0 %v289
    %452 = vmatpush.msra.mxu0 %v288
    %453 = vmatpush.msra.mxu0 %v287
    %454 = vmatpush.msra.mxu0 %v286
    %455 = vmatpush.msra.mxu0 %v285
    %456 = vmatpush.msra.mxu0 %v284
    %457 = vmatpush.msra.mxu0 %v283
    %458 = vmatpush.msra.mxu0 %v282
    %459 = vmatpush.msra.mxu0 %v281
    %460 = vmatpush.msra.mxu0 %v280
    %461 = vmatpush.msra.mxu0 %v279
    %462 = vmatpush.msra.mxu0 %v278
    %463 = vmatpush.msra.mxu0 %v277
    %464 = vmatpush.msra.mxu0 %v276
    %465 = vmatpush.msra.mxu0 %v275
    %466 = vmatpush.msra.mxu0 %v274
    %467 = vmatmul.f32.gmra.mxu0 %v302
    %v468 = vpop.f32.mrf.mxu0
    %v469 = vadd.f32 %v449, %v468
    %470 = vdwg.mxu0
    %471 = vst [vmem:[#allocation1] ss:$4 sm:$0xff] %v31
    %s472 = scalar_lea.vmem [#allocation1], 32
    %473 = vst [vmem:[%s472] ss:$4 sm:$0xff] %v32
    %v474 = vld.sshfl [vmem:[#allocation1] sm:$0xff pattern:$0x73625140]
    %v475 = vld.sshfl [vmem:[#allocation1 + $0x8] sm:$0xff pattern:$0x73625140]
    %v476 = vld.sshfl [vmem:[#allocation1 + $0x10] sm:$0xff pattern:$0x73625140]
    %v477 = vld.sshfl [vmem:[#allocation1 + $0x18] sm:$0xff pattern:$0x73625140]
    %v478 = vld.sshfl [vmem:[#allocation1 + $0x20] sm:$0xff pattern:$0x73625140]
    %v479 = vld.sshfl [vmem:[#allocation1 + $0x28] sm:$0xff pattern:$0x73625140]
    %v480 = vld.sshfl [vmem:[#allocation1 + $0x30] sm:$0xff pattern:$0x73625140]
    %v481 = vld.sshfl [vmem:[#allocation1 + $0x38] sm:$0xff pattern:$0x73625140]
    %490 = vmatpush.msra.mxu0 %v48
    %491 = vmatpush.msra.mxu0 %v47
    %492 = vmatpush.msra.mxu0 %v46
    %493 = vmatpush.msra.mxu0 %v45
    %494 = vmatpush.msra.mxu0 %v44
    %495 = vmatpush.msra.mxu0 %v43
    %496 = vmatpush.msra.mxu0 %v42
    %497 = vmatpush.msra.mxu0 %v41
    %498 = vmatpush.msra.mxu0 %v40
    %499 = vmatpush.msra.mxu0 %v39
    %500 = vmatpush.msra.mxu0 %v38
    %501 = vmatpush.msra.mxu0 %v37
    %502 = vmatpush.msra.mxu0 %v36
    %503 = vmatpush.msra.mxu0 %v35
    %504 = vmatpush.msra.mxu0 %v34
    %505 = vmatpush.msra.mxu0 %v33
    %506 = vmatmul.f32.gmra.mxu0 %v474
    %v507 = vpop.f32.mrf.mxu0
    %v508 = vadd.f32 %v469, %v507
    %509 = vdwg.mxu0
    %510 = vmatpush.msra.mxu0 %v64
    %511 = vmatpush.msra.mxu0 %v63
    %512 = vmatpush.msra.mxu0 %v62
    %513 = vmatpush.msra.mxu0 %v61
    %514 = vmatpush.msra.mxu0 %v60
    %515 = vmatpush.msra.mxu0 %v59
    %516 = vmatpush.msra.mxu0 %v58
    %517 = vmatpush.msra.mxu0 %v57
    %518 = vmatpush.msra.mxu0 %v56
    %519 = vmatpush.msra.mxu0 %v55
    %520 = vmatpush.msra.mxu0 %v54
    %521 = vmatpush.msra.mxu0 %v53
    %522 = vmatpush.msra.mxu0 %v52
    %523 = vmatpush.msra.mxu0 %v51
    %524 = vmatpush.msra.mxu0 %v50
    %525 = vmatpush.msra.mxu0 %v49
    %526 = vmatmul.f32.gmra.mxu0 %v475
    %v527 = vpop.f32.mrf.mxu0
    %v528 = vadd.f32 %v508, %v527
    %529 = vdwg.mxu0
    %530 = vmatpush.msra.mxu0 %v80
    %531 = vmatpush.msra.mxu0 %v79
    %532 = vmatpush.msra.mxu0 %v78
    %533 = vmatpush.msra.mxu0 %v77
    %534 = vmatpush.msra.mxu0 %v76
    %535 = vmatpush.msra.mxu0 %v75
    %536 = vmatpush.msra.mxu0 %v74
    %537 = vmatpush.msra.mxu0 %v73
    %538 = vmatpush.msra.mxu0 %v72
    %539 = vmatpush.msra.mxu0 %v71
    %540 = vmatpush.msra.mxu0 %v70
    %541 = vmatpush.msra.mxu0 %v69
    %542 = vmatpush.msra.mxu0 %v68
    %543 = vmatpush.msra.mxu0 %v67
    %544 = vmatpush.msra.mxu0 %v66
    %545 = vmatpush.msra.mxu0 %v65
    %546 = vmatmul.f32.gmra.mxu0 %v476
    %v547 = vpop.f32.mrf.mxu0
    %v548 = vadd.f32 %v528, %v547
    %549 = vdwg.mxu0
    %550 = vmatpush.msra.mxu0 %v96
    %551 = vmatpush.msra.mxu0 %v95
    %552 = vmatpush.msra.mxu0 %v94
    %553 = vmatpush.msra.mxu0 %v93
    %554 = vmatpush.msra.mxu0 %v92
    %555 = vmatpush.msra.mxu0 %v91
    %556 = vmatpush.msra.mxu0 %v90
    %557 = vmatpush.msra.mxu0 %v89
    %558 = vmatpush.msra.mxu0 %v88
    %559 = vmatpush.msra.mxu0 %v87
    %560 = vmatpush.msra.mxu0 %v86
    %561 = vmatpush.msra.mxu0 %v85
    %562 = vmatpush.msra.mxu0 %v84
    %563 = vmatpush.msra.mxu0 %v83
    %564 = vmatpush.msra.mxu0 %v82
    %565 = vmatpush.msra.mxu0 %v81
    %566 = vmatmul.f32.gmra.mxu0 %v477
    %v567 = vpop.f32.mrf.mxu0
    %v568 = vadd.f32 %v548, %v567
    %569 = vdwg.mxu0
    %570 = vmatpush.msra.mxu0 %v112
    %571 = vmatpush.msra.mxu0 %v111
    %572 = vmatpush.msra.mxu0 %v110
    %573 = vmatpush.msra.mxu0 %v109
    %574 = vmatpush.msra.mxu0 %v108
    %575 = vmatpush.msra.mxu0 %v107
    %576 = vmatpush.msra.mxu0 %v106
    %577 = vmatpush.msra.mxu0 %v105
    %578 = vmatpush.msra.mxu0 %v104
    %579 = vmatpush.msra.mxu0 %v103
    %580 = vmatpush.msra.mxu0 %v102
    %581 = vmatpush.msra.mxu0 %v101
    %582 = vmatpush.msra.mxu0 %v100
    %583 = vmatpush.msra.mxu0 %v99
    %584 = vmatpush.msra.mxu0 %v98
    %585 = vmatpush.msra.mxu0 %v97
    %586 = vmatmul.f32.gmra.mxu0 %v478
    %v587 = vpop.f32.mrf.mxu0
    %v588 = vadd.f32 %v568, %v587
    %589 = vdwg.mxu0
    %590 = vmatpush.msra.mxu0 %v128
    %591 = vmatpush.msra.mxu0 %v127
    %592 = vmatpush.msra.mxu0 %v126
    %593 = vmatpush.msra.mxu0 %v125
    %594 = vmatpush.msra.mxu0 %v124
    %595 = vmatpush.msra.mxu0 %v123
    %596 = vmatpush.msra.mxu0 %v122
    %597 = vmatpush.msra.mxu0 %v121
    %598 = vmatpush.msra.mxu0 %v120
    %599 = vmatpush.msra.mxu0 %v119
    %600 = vmatpush.msra.mxu0 %v118
    %601 = vmatpush.msra.mxu0 %v117
    %602 = vmatpush.msra.mxu0 %v116
    %603 = vmatpush.msra.mxu0 %v115
    %604 = vmatpush.msra.mxu0 %v114
    %605 = vmatpush.msra.mxu0 %v113
    %606 = vmatmul.f32.gmra.mxu0 %v479
    %v607 = vpop.f32.mrf.mxu0
    %v608 = vadd.f32 %v588, %v607
    %609 = vdwg.mxu0
    %610 = vmatpush.msra.mxu0 %v144
    %611 = vmatpush.msra.mxu0 %v143
    %612 = vmatpush.msra.mxu0 %v142
    %613 = vmatpush.msra.mxu0 %v141
    %614 = vmatpush.msra.mxu0 %v140
    %615 = vmatpush.msra.mxu0 %v139
    %616 = vmatpush.msra.mxu0 %v138
    %617 = vmatpush.msra.mxu0 %v137
    %618 = vmatpush.msra.mxu0 %v136
    %619 = vmatpush.msra.mxu0 %v135
    %620 = vmatpush.msra.mxu0 %v134
    %621 = vmatpush.msra.mxu0 %v133
    %622 = vmatpush.msra.mxu0 %v132
    %623 = vmatpush.msra.mxu0 %v131
    %624 = vmatpush.msra.mxu0 %v130
    %625 = vmatpush.msra.mxu0 %v129
    %626 = vmatmul.f32.gmra.mxu0 %v480
    %v627 = vpop.f32.mrf.mxu0
    %v628 = vadd.f32 %v608, %v627
    %629 = vdwg.mxu0
    %630 = vmatpush.msra.mxu0 %v160
    %631 = vmatpush.msra.mxu0 %v159
    %632 = vmatpush.msra.mxu0 %v158
    %633 = vmatpush.msra.mxu0 %v157
    %634 = vmatpush.msra.mxu0 %v156
    %635 = vmatpush.msra.mxu0 %v155
    %636 = vmatpush.msra.mxu0 %v154
    %637 = vmatpush.msra.mxu0 %v153
    %638 = vmatpush.msra.mxu0 %v152
    %639 = vmatpush.msra.mxu0 %v151
    %640 = vmatpush.msra.mxu0 %v150
    %641 = vmatpush.msra.mxu0 %v149
    %642 = vmatpush.msra.mxu0 %v148
    %643 = vmatpush.msra.mxu0 %v147
    %644 = vmatpush.msra.mxu0 %v146
    %645 = vmatpush.msra.mxu0 %v145
    %646 = vmatmul.f32.gmra.mxu0 %v481
    %v647 = vpop.f32.mrf.mxu0
    %v648 = vadd.f32 %v628, %v647
    %649 = vdwg.mxu0
    %s650 = scalar_lea.vmem [#allocation2], 2048
    %v651 = vld [vmem:[%s650] sm:$0xff]
    %v652 = vld [vmem:[%s650 + $0x8] sm:$0xff]
    %v653 = vld [vmem:[%s650 + $0x10] sm:$0xff]
    %v654 = vld [vmem:[%s650 + $0x18] sm:$0xff]
    %v655 = vld [vmem:[%s650 + $0x20] sm:$0xff]
    %v656 = vld [vmem:[%s650 + $0x28] sm:$0xff]
    %v657 = vld [vmem:[%s650 + $0x30] sm:$0xff]
    %v658 = vld [vmem:[%s650 + $0x38] sm:$0xff]
    %v659 = vld [vmem:[%s650 + $0x40] sm:$0xff]
    %v660 = vld [vmem:[%s650 + $0x48] sm:$0xff]
    %v661 = vld [vmem:[%s650 + $0x50] sm:$0xff]
    %v662 = vld [vmem:[%s650 + $0x58] sm:$0xff]
    %v663 = vld [vmem:[%s650 + $0x60] sm:$0xff]
    %v664 = vld [vmem:[%s650 + $0x68] sm:$0xff]
    %v665 = vld [vmem:[%s650 + $0x70] sm:$0xff]
    %v666 = vld [vmem:[%s650 + $0x78] sm:$0xff]
    %v667 = vld [vmem:[%s650 + $0x80] sm:$0xff]
    %v668 = vld [vmem:[%s650 + $0x88] sm:$0xff]
    %v669 = vld [vmem:[%s650 + $0x90] sm:$0xff]
    %v670 = vld [vmem:[%s650 + $0x98] sm:$0xff]
    %v671 = vld [vmem:[%s650 + $0xa0] sm:$0xff]
    %v672 = vld [vmem:[%s650 + $0xa8] sm:$0xff]
    %v673 = vld [vmem:[%s650 + $0xb0] sm:$0xff]
    %v674 = vld [vmem:[%s650 + $0xb8] sm:$0xff]
    %v675 = vld [vmem:[%s650 + $0xc0] sm:$0xff]
    %v676 = vld [vmem:[%s650 + $0xc8] sm:$0xff]
    %v677 = vld [vmem:[%s650 + $0xd0] sm:$0xff]
    %v678 = vld [vmem:[%s650 + $0xd8] sm:$0xff]
    %v679 = vld [vmem:[%s650 + $0xe0] sm:$0xff]
    %v680 = vld [vmem:[%s650 + $0xe8] sm:$0xff]
    %v681 = vld [vmem:[%s650 + $0xf0] sm:$0xff]
    %v682 = vld [vmem:[%s650 + $0xf8] sm:$0xff]
    %v683 = vld [vmem:[%s650 + $0x100] sm:$0xff]
    %v684 = vld [vmem:[%s650 + $0x108] sm:$0xff]
    %v685 = vld [vmem:[%s650 + $0x110] sm:$0xff]
    %v686 = vld [vmem:[%s650 + $0x118] sm:$0xff]
    %v687 = vld [vmem:[%s650 + $0x120] sm:$0xff]
    %v688 = vld [vmem:[%s650 + $0x128] sm:$0xff]
    %v689 = vld [vmem:[%s650 + $0x130] sm:$0xff]
    %v690 = vld [vmem:[%s650 + $0x138] sm:$0xff]
    %v691 = vld [vmem:[%s650 + $0x140] sm:$0xff]
    %v692 = vld [vmem:[%s650 + $0x148] sm:$0xff]
    %v693 = vld [vmem:[%s650 + $0x150] sm:$0xff]
    %v694 = vld [vmem:[%s650 + $0x158] sm:$0xff]
    %v695 = vld [vmem:[%s650 + $0x160] sm:$0xff]
    %v696 = vld [vmem:[%s650 + $0x168] sm:$0xff]
    %v697 = vld [vmem:[%s650 + $0x170] sm:$0xff]
    %v698 = vld [vmem:[%s650 + $0x178] sm:$0xff]
    %v699 = vld [vmem:[%s650 + $0x180] sm:$0xff]
    %v700 = vld [vmem:[%s650 + $0x188] sm:$0xff]
    %v701 = vld [vmem:[%s650 + $0x190] sm:$0xff]
    %v702 = vld [vmem:[%s650 + $0x198] sm:$0xff]
    %v703 = vld [vmem:[%s650 + $0x1a0] sm:$0xff]
    %v704 = vld [vmem:[%s650 + $0x1a8] sm:$0xff]
    %v705 = vld [vmem:[%s650 + $0x1b0] sm:$0xff]
    %v706 = vld [vmem:[%s650 + $0x1b8] sm:$0xff]
    %v707 = vld [vmem:[%s650 + $0x1c0] sm:$0xff]
    %v708 = vld [vmem:[%s650 + $0x1c8] sm:$0xff]
    %v709 = vld [vmem:[%s650 + $0x1d0] sm:$0xff]
    %v710 = vld [vmem:[%s650 + $0x1d8] sm:$0xff]
    %v711 = vld [vmem:[%s650 + $0x1e0] sm:$0xff]
    %v712 = vld [vmem:[%s650 + $0x1e8] sm:$0xff]
    %v713 = vld [vmem:[%s650 + $0x1f0] sm:$0xff]
    %v714 = vld [vmem:[%s650 + $0x1f8] sm:$0xff]
    %v715 = vld [vmem:[%s650 + $0x200] sm:$0xff]
    %v716 = vld [vmem:[%s650 + $0x208] sm:$0xff]
    %v717 = vld [vmem:[%s650 + $0x210] sm:$0xff]
    %v718 = vld [vmem:[%s650 + $0x218] sm:$0xff]
    %v719 = vld [vmem:[%s650 + $0x220] sm:$0xff]
    %v720 = vld [vmem:[%s650 + $0x228] sm:$0xff]
    %v721 = vld [vmem:[%s650 + $0x230] sm:$0xff]
    %v722 = vld [vmem:[%s650 + $0x238] sm:$0xff]
    %v723 = vld [vmem:[%s650 + $0x240] sm:$0xff]
    %v724 = vld [vmem:[%s650 + $0x248] sm:$0xff]
    %v725 = vld [vmem:[%s650 + $0x250] sm:$0xff]
    %v726 = vld [vmem:[%s650 + $0x258] sm:$0xff]
    %v727 = vld [vmem:[%s650 + $0x260] sm:$0xff]
    %v728 = vld [vmem:[%s650 + $0x268] sm:$0xff]
    %v729 = vld [vmem:[%s650 + $0x270] sm:$0xff]
    %v730 = vld [vmem:[%s650 + $0x278] sm:$0xff]
    %v731 = vld [vmem:[%s650 + $0x280] sm:$0xff]
    %v732 = vld [vmem:[%s650 + $0x288] sm:$0xff]
    %v733 = vld [vmem:[%s650 + $0x290] sm:$0xff]
    %v734 = vld [vmem:[%s650 + $0x298] sm:$0xff]
    %v735 = vld [vmem:[%s650 + $0x2a0] sm:$0xff]
    %v736 = vld [vmem:[%s650 + $0x2a8] sm:$0xff]
    %v737 = vld [vmem:[%s650 + $0x2b0] sm:$0xff]
    %v738 = vld [vmem:[%s650 + $0x2b8] sm:$0xff]
    %v739 = vld [vmem:[%s650 + $0x2c0] sm:$0xff]
    %v740 = vld [vmem:[%s650 + $0x2c8] sm:$0xff]
    %v741 = vld [vmem:[%s650 + $0x2d0] sm:$0xff]
    %v742 = vld [vmem:[%s650 + $0x2d8] sm:$0xff]
    %v743 = vld [vmem:[%s650 + $0x2e0] sm:$0xff]
    %v744 = vld [vmem:[%s650 + $0x2e8] sm:$0xff]
    %v745 = vld [vmem:[%s650 + $0x2f0] sm:$0xff]
    %v746 = vld [vmem:[%s650 + $0x2f8] sm:$0xff]
    %v747 = vld [vmem:[%s650 + $0x300] sm:$0xff]
    %v748 = vld [vmem:[%s650 + $0x308] sm:$0xff]
    %v749 = vld [vmem:[%s650 + $0x310] sm:$0xff]
    %v750 = vld [vmem:[%s650 + $0x318] sm:$0xff]
    %v751 = vld [vmem:[%s650 + $0x320] sm:$0xff]
    %v752 = vld [vmem:[%s650 + $0x328] sm:$0xff]
    %v753 = vld [vmem:[%s650 + $0x330] sm:$0xff]
    %v754 = vld [vmem:[%s650 + $0x338] sm:$0xff]
    %v755 = vld [vmem:[%s650 + $0x340] sm:$0xff]
    %v756 = vld [vmem:[%s650 + $0x348] sm:$0xff]
    %v757 = vld [vmem:[%s650 + $0x350] sm:$0xff]
    %v758 = vld [vmem:[%s650 + $0x358] sm:$0xff]
    %v759 = vld [vmem:[%s650 + $0x360] sm:$0xff]
    %v760 = vld [vmem:[%s650 + $0x368] sm:$0xff]
    %v761 = vld [vmem:[%s650 + $0x370] sm:$0xff]
    %v762 = vld [vmem:[%s650 + $0x378] sm:$0xff]
    %v763 = vld [vmem:[%s650 + $0x380] sm:$0xff]
    %v764 = vld [vmem:[%s650 + $0x388] sm:$0xff]
    %v765 = vld [vmem:[%s650 + $0x390] sm:$0xff]
    %v766 = vld [vmem:[%s650 + $0x398] sm:$0xff]
    %v767 = vld [vmem:[%s650 + $0x3a0] sm:$0xff]
    %v768 = vld [vmem:[%s650 + $0x3a8] sm:$0xff]
    %v769 = vld [vmem:[%s650 + $0x3b0] sm:$0xff]
    %v770 = vld [vmem:[%s650 + $0x3b8] sm:$0xff]
    %v771 = vld [vmem:[%s650 + $0x3c0] sm:$0xff]
    %v772 = vld [vmem:[%s650 + $0x3c8] sm:$0xff]
    %v773 = vld [vmem:[%s650 + $0x3d0] sm:$0xff]
    %v774 = vld [vmem:[%s650 + $0x3d8] sm:$0xff]
    %v775 = vld [vmem:[%s650 + $0x3e0] sm:$0xff]
    %v776 = vld [vmem:[%s650 + $0x3e8] sm:$0xff]
    %v777 = vld [vmem:[%s650 + $0x3f0] sm:$0xff]
    %v778 = vld [vmem:[%s650 + $0x3f8] sm:$0xff]
    %779 = vst [vmem:[#allocation1] ss:$4 sm:$0xff] %v31
    %s780 = scalar_lea.vmem [#allocation1], 32
    %781 = vst [vmem:[%s780] ss:$4 sm:$0xff] %v32
    %v782 = vld.sshfl [vmem:[#allocation1] sm:$0xff pattern:$0x73625140]
    %v783 = vld.sshfl [vmem:[#allocation1 + $0x8] sm:$0xff pattern:$0x73625140]
    %v784 = vld.sshfl [vmem:[#allocation1 + $0x10] sm:$0xff pattern:$0x73625140]
    %v785 = vld.sshfl [vmem:[#allocation1 + $0x18] sm:$0xff pattern:$0x73625140]
    %v786 = vld.sshfl [vmem:[#allocation1 + $0x20] sm:$0xff pattern:$0x73625140]
    %v787 = vld.sshfl [vmem:[#allocation1 + $0x28] sm:$0xff pattern:$0x73625140]
    %v788 = vld.sshfl [vmem:[#allocation1 + $0x30] sm:$0xff pattern:$0x73625140]
    %v789 = vld.sshfl [vmem:[#allocation1 + $0x38] sm:$0xff pattern:$0x73625140]
    %798 = vmatpush.msra.mxu0 %v666
    %799 = vmatpush.msra.mxu0 %v665
    %800 = vmatpush.msra.mxu0 %v664
    %801 = vmatpush.msra.mxu0 %v663
    %802 = vmatpush.msra.mxu0 %v662
    %803 = vmatpush.msra.mxu0 %v661
    %804 = vmatpush.msra.mxu0 %v660
    %805 = vmatpush.msra.mxu0 %v659
    %806 = vmatpush.msra.mxu0 %v658
    %807 = vmatpush.msra.mxu0 %v657
    %808 = vmatpush.msra.mxu0 %v656
    %809 = vmatpush.msra.mxu0 %v655
    %810 = vmatpush.msra.mxu0 %v654
    %811 = vmatpush.msra.mxu0 %v653
    %812 = vmatpush.msra.mxu0 %v652
    %813 = vmatpush.msra.mxu0 %v651
    %814 = vmatmul.f32.gmra.mxu0 %v782
    %v815 = vpop.f32.mrf.mxu0
    %v816 = vadd.f32 0.0, %v815
    %817 = vdwg.mxu0
    %818 = vmatpush.msra.mxu0 %v682
    %819 = vmatpush.msra.mxu0 %v681
    %820 = vmatpush.msra.mxu0 %v680
    %821 = vmatpush.msra.mxu0 %v679
    %822 = vmatpush.msra.mxu0 %v678
    %823 = vmatpush.msra.mxu0 %v677
    %824 = vmatpush.msra.mxu0 %v676
    %825 = vmatpush.msra.mxu0 %v675
    %826 = vmatpush.msra.mxu0 %v674
    %827 = vmatpush.msra.mxu0 %v673
    %828 = vmatpush.msra.mxu0 %v672
    %829 = vmatpush.msra.mxu0 %v671
    %830 = vmatpush.msra.mxu0 %v670
    %831 = vmatpush.msra.mxu0 %v669
    %832 = vmatpush.msra.mxu0 %v668
    %833 = vmatpush.msra.mxu0 %v667
    %834 = vmatmul.f32.gmra.mxu0 %v783
    %v835 = vpop.f32.mrf.mxu0
    %v836 = vadd.f32 %v816, %v835
    %837 = vdwg.mxu0
    %838 = vmatpush.msra.mxu0 %v698
    %839 = vmatpush.msra.mxu0 %v697
    %840 = vmatpush.msra.mxu0 %v696
    %841 = vmatpush.msra.mxu0 %v695
    %842 = vmatpush.msra.mxu0 %v694
    %843 = vmatpush.msra.mxu0 %v693
    %844 = vmatpush.msra.mxu0 %v692
    %845 = vmatpush.msra.mxu0 %v691
    %846 = vmatpush.msra.mxu0 %v690
    %847 = vmatpush.msra.mxu0 %v689
    %848 = vmatpush.msra.mxu0 %v688
    %849 = vmatpush.msra.mxu0 %v687
    %850 = vmatpush.msra.mxu0 %v686
    %851 = vmatpush.msra.mxu0 %v685
    %852 = vmatpush.msra.mxu0 %v684
    %853 = vmatpush.msra.mxu0 %v683
    %854 = vmatmul.f32.gmra.mxu0 %v784
    %v855 = vpop.f32.mrf.mxu0
    %v856 = vadd.f32 %v836, %v855
    %857 = vdwg.mxu0
    %858 = vmatpush.msra.mxu0 %v714
    %859 = vmatpush.msra.mxu0 %v713
    %860 = vmatpush.msra.mxu0 %v712
    %861 = vmatpush.msra.mxu0 %v711
    %862 = vmatpush.msra.mxu0 %v710
    %863 = vmatpush.msra.mxu0 %v709
    %864 = vmatpush.msra.mxu0 %v708
    %865 = vmatpush.msra.mxu0 %v707
    %866 = vmatpush.msra.mxu0 %v706
    %867 = vmatpush.msra.mxu0 %v705
    %868 = vmatpush.msra.mxu0 %v704
    %869 = vmatpush.msra.mxu0 %v703
    %870 = vmatpush.msra.mxu0 %v702
    %871 = vmatpush.msra.mxu0 %v701
    %872 = vmatpush.msra.mxu0 %v700
    %873 = vmatpush.msra.mxu0 %v699
    %874 = vmatmul.f32.gmra.mxu0 %v785
    %v875 = vpop.f32.mrf.mxu0
    %v876 = vadd.f32 %v856, %v875
    %877 = vdwg.mxu0
    %878 = vmatpush.msra.mxu0 %v730
    %879 = vmatpush.msra.mxu0 %v729
    %880 = vmatpush.msra.mxu0 %v728
    %881 = vmatpush.msra.mxu0 %v727
    %882 = vmatpush.msra.mxu0 %v726
    %883 = vmatpush.msra.mxu0 %v725
    %884 = vmatpush.msra.mxu0 %v724
    %885 = vmatpush.msra.mxu0 %v723
    %886 = vmatpush.msra.mxu0 %v722
    %887 = vmatpush.msra.mxu0 %v721
    %888 = vmatpush.msra.mxu0 %v720
    %889 = vmatpush.msra.mxu0 %v719
    %890 = vmatpush.msra.mxu0 %v718
    %891 = vmatpush.msra.mxu0 %v717
    %892 = vmatpush.msra.mxu0 %v716
    %893 = vmatpush.msra.mxu0 %v715
    %894 = vmatmul.f32.gmra.mxu0 %v786
    %v895 = vpop.f32.mrf.mxu0
    %v896 = vadd.f32 %v876, %v895
    %897 = vdwg.mxu0
    %898 = vmatpush.msra.mxu0 %v746
    %899 = vmatpush.msra.mxu0 %v745
    %900 = vmatpush.msra.mxu0 %v744
    %901 = vmatpush.msra.mxu0 %v743
    %902 = vmatpush.msra.mxu0 %v742
    %903 = vmatpush.msra.mxu0 %v741
    %904 = vmatpush.msra.mxu0 %v740
    %905 = vmatpush.msra.mxu0 %v739
    %906 = vmatpush.msra.mxu0 %v738
    %907 = vmatpush.msra.mxu0 %v737
    %908 = vmatpush.msra.mxu0 %v736
    %909 = vmatpush.msra.mxu0 %v735
    %910 = vmatpush.msra.mxu0 %v734
    %911 = vmatpush.msra.mxu0 %v733
    %912 = vmatpush.msra.mxu0 %v732
    %913 = vmatpush.msra.mxu0 %v731
    %914 = vmatmul.f32.gmra.mxu0 %v787
    %v915 = vpop.f32.mrf.mxu0
    %v916 = vadd.f32 %v896, %v915
    %917 = vdwg.mxu0
    %918 = vmatpush.msra.mxu0 %v762
    %919 = vmatpush.msra.mxu0 %v761
    %920 = vmatpush.msra.mxu0 %v760
    %921 = vmatpush.msra.mxu0 %v759
    %922 = vmatpush.msra.mxu0 %v758
    %923 = vmatpush.msra.mxu0 %v757
    %924 = vmatpush.msra.mxu0 %v756
    %925 = vmatpush.msra.mxu0 %v755
    %926 = vmatpush.msra.mxu0 %v754
    %927 = vmatpush.msra.mxu0 %v753
    %928 = vmatpush.msra.mxu0 %v752
    %929 = vmatpush.msra.mxu0 %v751
    %930 = vmatpush.msra.mxu0 %v750
    %931 = vmatpush.msra.mxu0 %v749
    %932 = vmatpush.msra.mxu0 %v748
    %933 = vmatpush.msra.mxu0 %v747
    %934 = vmatmul.f32.gmra.mxu0 %v788
    %v935 = vpop.f32.mrf.mxu0
    %v936 = vadd.f32 %v916, %v935
    %937 = vdwg.mxu0
    %938 = vmatpush.msra.mxu0 %v778
    %939 = vmatpush.msra.mxu0 %v777
    %940 = vmatpush.msra.mxu0 %v776
    %941 = vmatpush.msra.mxu0 %v775
    %942 = vmatpush.msra.mxu0 %v774
    %943 = vmatpush.msra.mxu0 %v773
    %944 = vmatpush.msra.mxu0 %v772
    %945 = vmatpush.msra.mxu0 %v771
    %946 = vmatpush.msra.mxu0 %v770
    %947 = vmatpush.msra.mxu0 %v769
    %948 = vmatpush.msra.mxu0 %v768
    %949 = vmatpush.msra.mxu0 %v767
    %950 = vmatpush.msra.mxu0 %v766
    %951 = vmatpush.msra.mxu0 %v765
    %952 = vmatpush.msra.mxu0 %v764
    %953 = vmatpush.msra.mxu0 %v763
    %954 = vmatmul.f32.gmra.mxu0 %v789
    %v955 = vpop.f32.mrf.mxu0
    %v956 = vadd.f32 %v936, %v955
    %957 = vdwg.mxu0
    %v958 = vadd.f32 %v648, %v956
    %v959 = vmul.f32 %v958, 0.33333334
    %v960 = vld [vmem:[%s2] sm:$0x1]
    %v962 = vperm.slane %v960, 0
    %v964 = vadd.f32 %v959, %v962
    %965 = vst [vmem:[#allocation5] sm:$0x3] %v964
    // Predicated region
    $region18: #{ensemble_forward.1} parent=1 // pred_check
      _
    $region19: #{ensemble_forward.1} parent=1 // pred_check_branch
      %967 = sbr.rel (0) target = $region21
    $region20: #{ensemble_forward.1} parent=1 // pred_region
      %969 = vsyncadd [#allocation4], 0
      %s971 = sshll.u32 [#allocation5], 4
      %s972 = int_to_ptr.vmem [resolvable:$true] %s971
      %s973 = sshll.u32 %s3, 4
      %s974 = int_to_ptr.hbm [resolvable:$true] %s973
      %976 = dma.vmem_to_hbm [thread:$0]  %s972, 32, %s974, [#allocation4]
    $region21: #{ensemble_forward.1} parent=1 // pred_fallthru
      _
    // Predicated region
    $region22: #{ensemble_forward.1} parent=1 // pred_check
      _
    $region23: #{ensemble_forward.1} parent=1 // pred_check_branch
      %978 = sbr.rel (0) target = $region25
    $region24: #{ensemble_forward.1} parent=1 // pred_region
      %980 = dma.done [#allocation4], 32
    $region25: #{ensemble_forward.1} parent=1 // pred_fallthru
      _
    %981 = vsyncpa [#allocation3], 1
    %982 = vsyncpa [#allocation4], 1

</llo_original>
